<compile_context>
chip_gen: v5e
topology: v5e:2x2
jax: 0.10.0
libtpu: 0.0.40
codegen_flags: <defaults>
</compile_context>

<pallas_src>
import functools

import jax
import jax.numpy as jnp
from jax.experimental import pallas as pl
from jax.experimental.pallas import tpu as pltpu

LANE = 128
MAX_BLOCK_ROWS = 8192   # (8192, 128) f32 tile = 4 MiB per input buffer
NUM_CORES = 2           # leading "parallel" grid axis (v7x 2-TC split)


def _round_up(x, m):
    return (x + m - 1) // m * m


def _focal_loss_kernel(x_ref, t_ref, o_ref, acc_ref, *,
                       alpha, gamma, tiles_per_core, last_tile,
                       last_full_rows, rem_lanes, needs_mask, has_dups,
                       approx_recip):
    c = pl.program_id(0)
    j = pl.program_id(1)
    tile_id = c * tiles_per_core + j   # intended tile (>= total tiles => dup)

    @pl.when(j == 0)
    def _():
        acc_ref[...] = jnp.zeros_like(acc_ref)

    x = x_ref[...].astype(jnp.float32)
    t = t_ref[...].astype(jnp.float32)

    # Shared stable pieces: e = exp(-|x|) feeds sigmoid, log(sigmoid(x)) and
    # log(1 - sigmoid(x)) with one exp + one log.
    e = jnp.exp(-jnp.abs(x))
    one_plus_e = 1.0 + e
    log1pe = jnp.log(one_plus_e)
    numer = jnp.where(x >= 0.0, 1.0, e)
    if approx_recip:
        probs = numer * pl.reciprocal(one_plus_e, approx=True)   # EUP vrcp
    else:
        probs = numer / one_plus_e
    log_p = jnp.minimum(x, 0.0) - log1pe           # log(sigmoid(x))
    log_1mp = -jnp.maximum(x, 0.0) - log1pe        # log(1 - sigmoid(x))

    # nn.BCELoss(reduction='none') clamps the log terms at -100; fuse the
    # affine blend:  -(t*lp + (1-t)*l1) = -(l1 + t*(lp - l1)).
    log_p_c = jnp.maximum(log_p, -100.0)
    log_1mp_c = jnp.maximum(log_1mp, -100.0)
    bce = -(log_1mp_c + t * (log_p_c - log_1mp_c))

    # pt = p*t + (1-p)*(1-t) = (1-p) + t*(p - (1-p));  alpha_t fused likewise.
    one_minus_p = 1.0 - probs
    pt = one_minus_p + t * (probs - one_minus_p)
    alpha_t = (1.0 - alpha) + (2.0 * alpha - 1.0) * t
    one_minus_pt = 1.0 - pt
    if gamma == 2.0:
        pow_term = one_minus_pt * one_minus_pt            # no exp/log pow
    elif float(gamma).is_integer() and gamma >= 0.0:
        pow_term = jnp.ones_like(one_minus_pt)
        for _ in range(int(gamma)):
            pow_term = pow_term * one_minus_pt
    else:
        pow_term = jnp.power(one_minus_pt, gamma)
    # NOTE: pt.log() is unclamped in the reference module; kept that way.
    focal = -alpha_t * pow_term * jnp.log(pt)

    loss = focal + bce

    block_rows = loss.shape[0]

    def _vreg_partial(v):
        # (block_rows, 128) -> (8, 128) partial sums: same number of VALU
        # adds, but the persistent accumulator is a single 4 KiB vreg tile.
        return v.reshape(block_rows // 8, 8, LANE).sum(axis=0)

    if needs_mask or has_dups:
        @pl.when(tile_id < last_tile)
        def _():
            acc_ref[...] += _vreg_partial(loss)

        @pl.when(tile_id == last_tile)
        def _():
            if needs_mask:
                rows = jax.lax.broadcasted_iota(jnp.int32, loss.shape, 0)
                lanes = jax.lax.broadcasted_iota(jnp.int32, loss.shape, 1)
                valid = (rows < last_full_rows) | (
                    (rows == last_full_rows) & (lanes < rem_lanes))
                acc_ref[...] += _vreg_partial(jnp.where(valid, loss, 0.0))
            else:
                acc_ref[...] += _vreg_partial(loss)
        # tile_id > last_tile: duplicate (index-clamped) tiles contribute 0.
    else:
        acc_ref[...] += _vreg_partial(loss)

    @pl.when(j == tiles_per_core - 1)
    def _():
        o_ref[0] = acc_ref[...]     # per-core (8,128) partial-sum block


def binary_focal_loss(inputs, targets, *, alpha=0.25, gamma=2.0,
                      reduction='mean', approx_recip=True,
                      max_block_rows=MAX_BLOCK_ROWS):
    assert inputs.shape == targets.shape
    assert max_block_rows % 8 == 0
    if reduction not in ('mean', 'sum'):
        # TODO(synk): reduction='none' (full per-element tensor output) not
        # wired through this scalar-reduction kernel.
        raise NotImplementedError("only 'mean' and 'sum' reductions are supported")

    x = inputs.reshape(-1)
    t = targets.reshape(-1)
    n = x.shape[0]

    # Pad only to the 128-lane width (no-op for typical NCHW shapes); the
    # kernel masks the padded tail of the real last tile.
    n_lane = pl.cdiv(n, LANE) * LANE
    if n_lane != n:
        x = jnp.pad(x, (0, n_lane - n))
        t = jnp.pad(t, (0, n_lane - n))
    x2 = x.reshape(-1, LANE)
    t2 = t.reshape(-1, LANE)
    n_rows = x2.shape[0]

    # Tiny-input guard: keep at least one full (8,128) sublane tile.
    if n_rows < 8:
        pad_rows = 8 - n_rows
        x2 = jnp.pad(x2, ((0, pad_rows), (0, 0)))
        t2 = jnp.pad(t2, ((0, pad_rows), (0, 0)))
        n_rows = 8

    # Tile sizing: multiple of 8 rows, capped at max_block_rows (4 MiB f32 per
    # input buffer -> ~16 MiB double-buffered; fits v7x's 64 MiB-per-core VMEM
    # and v5e/v6e's 128 MiB with headroom).
    block_rows = min(max_block_rows,
                     _round_up(max(pl.cdiv(n_rows, NUM_CORES), 1), 8))
    total_tiles = pl.cdiv(n_rows, block_rows)
    num_cores = NUM_CORES if total_tiles >= NUM_CORES else 1
    tiles_per_core = pl.cdiv(total_tiles, num_cores)
    has_dups = num_cores * tiles_per_core > total_tiles

    # Static per-tile tail bounds (no on-device flat global index -> no int32
    # overflow for very large inputs).
    last_tile = total_tiles - 1
    rows_before_last = last_tile * block_rows
    full_rows_global = n // LANE
    rem_lanes = n % LANE
    last_full_rows = full_rows_global - rows_before_last
    needs_mask = last_full_rows < block_rows

    def in_index_map(c, j):
        # Clamp so duplicate trailing steps (odd tile count split across the
        # two cores) DMA the last in-bounds tile; kernel adds nothing for them.
        return (jnp.minimum(c * tiles_per_core + j, last_tile), 0)

    kernel = functools.partial(
        _focal_loss_kernel,
        alpha=float(alpha), gamma=float(gamma),
        tiles_per_core=tiles_per_core, last_tile=last_tile,
        last_full_rows=last_full_rows, rem_lanes=rem_lanes,
        needs_mask=needs_mask, has_dups=has_dups, approx_recip=approx_recip)

    # Raise scoped VMEM enough for double-buffered big tiles (v5e default is
    # only 16 MiB); stay well under v7x's 64 MiB per-core physical VMEM.
    dbl_buf_bytes = 2 * block_rows * LANE * (x2.dtype.itemsize + t2.dtype.itemsize)
    vmem_limit = int(min(max(dbl_buf_bytes + (4 << 20), 32 << 20), 100 << 20))

    partials = pl.pallas_call(
        kernel,
        out_shape=jax.ShapeDtypeStruct((num_cores, 8, LANE), jnp.float32),
        grid_spec=pltpu.PrefetchScalarGridSpec(
            num_scalar_prefetch=0,
            grid=(num_cores, tiles_per_core),
            in_specs=[
                pl.BlockSpec((block_rows, LANE), in_index_map),
                pl.BlockSpec((block_rows, LANE), in_index_map),
            ],
            out_specs=pl.BlockSpec((1, 8, LANE), lambda c, j: (c, 0, 0)),
            scratch_shapes=[pltpu.VMEM((8, LANE), jnp.float32)],
        ),
        compiler_params=pltpu.CompilerParams(
            dimension_semantics=("parallel", "arbitrary"),
            vmem_limit_bytes=vmem_limit),
    )(x2, t2)

    total = jnp.sum(partials)                 # combine per-core partials
    if reduction == 'mean':
        total = total * (1.0 / float(n))      # precomputed inverse divisor
    return total


def _reference(inputs, targets, alpha=0.25, gamma=2.0, reduction='mean'):
    # PyTorch-faithful reference (sigmoid -> BCELoss with -100 log clamp).
    probs = jax.nn.sigmoid(inputs)
    log_p = jnp.maximum(jnp.log(probs), -100.0)
    log_1mp = jnp.maximum(jnp.log(1.0 - probs), -100.0)
    bce = -(targets * log_p + (1.0 - targets) * log_1mp)
    pt = probs * targets + (1.0 - probs) * (1.0 - targets)
    alpha_t = alpha * targets + (1.0 - alpha) * (1.0 - targets)
    loss = -alpha_t * jnp.power(1.0 - pt, gamma) * jnp.log(pt) + bce
    if reduction == 'mean':
        return jnp.mean(loss)
    return jnp.sum(loss)


if __name__ == "__main__":
    key = jax.random.PRNGKey(0)
    k1, k2 = jax.random.split(key)
    # NCHW-shaped logits and binary targets, as the module's forward implies.
    inputs = jax.random.normal(k1, (2, 4, 16, 16), dtype=jnp.float32)
    targets = (jax.random.uniform(k2, (2, 4, 16, 16)) > 0.5).astype(jnp.float32)
    ref = _reference(inputs, targets)

    # Default fast path (approx EUP reciprocal): ~1e-4-level relative error.
    loss = jax.block_until_ready(binary_focal_loss(inputs, targets))
    assert jnp.allclose(loss, ref, rtol=2e-3, atol=1e-5), (loss, ref)

    # Exact-reciprocal path matches the PyTorch reference tightly.
    loss_exact = jax.block_until_ready(
        binary_focal_loss(inputs, targets, approx_recip=False))
    assert jnp.allclose(loss_exact, ref, rtol=1e-5, atol=1e-6), (loss_exact, ref)

    # Exercise the masked-tail path (non-128-multiple element count, partial
    # last block) and the 'sum' reduction.
    k3, k4 = jax.random.split(k2)
    inputs2 = jax.random.normal(k3, (3, 5, 7, 11), dtype=jnp.float32)
    targets2 = (jax.random.uniform(k4, (3, 5, 7, 11)) > 0.5).astype(jnp.float32)
    loss2 = jax.block_until_ready(
        binary_focal_loss(inputs2, targets2, reduction='sum', approx_recip=False))
    ref2 = _reference(inputs2, targets2, reduction='sum')
    assert jnp.allclose(loss2, ref2, rtol=1e-5, atol=1e-5), (loss2, ref2)

    # Exercise the duplicate-tile path (odd tile count split over 2 cores).
    inputs3 = jax.random.normal(k1, (3, 1, 8, 128), dtype=jnp.float32)
    targets3 = (jax.random.uniform(k2, (3, 1, 8, 128)) > 0.5).astype(jnp.float32)
    loss3 = jax.block_until_ready(
        binary_focal_loss(inputs3, targets3, approx_recip=False, max_block_rows=8))
    ref3 = _reference(inputs3, targets3)
    assert jnp.allclose(loss3, ref3, rtol=1e-5, atol=1e-6), (loss3, ref3)

    print("KERNEL_OK")
</pallas_src>

<mosaic_0001>
module attributes {stable_mosaic.version = 11 : i64} {
  func.func @_focal_loss_kernel(%arg0: i32, %arg1: i32, %arg2: memref<8x128xf32, #tpu.memory_space<vmem>>, %arg3: memref<8x128xf32, #tpu.memory_space<vmem>>, %arg4: memref<1x8x128xf32, #tpu.memory_space<vmem>>, %arg5: memref<8x128xf32, #tpu.memory_space<vmem>>) attributes {dimension_semantics = [#tpu.dimension_semantics<parallel>, #tpu.dimension_semantics<arbitrary>], iteration_bounds = array<i64: 2, 1>, scalar_prefetch = 0 : i64, scratch_operands = 1 : i64, tpu.core_type = #tpu.core_type<tc>, window_params = [{transform_indices = @transform_0, window_bounds = array<i64: 8, 128>}, {transform_indices = @transform_1, window_bounds = array<i64: 8, 128>}, {transform_indices = @transform_2, window_bounds = array<i64: 1, 8, 128>}]} {
    %c0_i32 = arith.constant 0 : i32
    %0 = arith.cmpi eq, %arg1, %c0_i32 : i32
    %1 = arith.extui %0 : i1 to i32
    %c0_i32_0 = arith.constant 0 : i32
    %2 = arith.cmpi ne, %1, %c0_i32_0 : i32
    scf.if %2 {
      %cst_25 = arith.constant 0.000000e+00 : f32
      %61 = vector.broadcast %cst_25 : f32 to vector<8x128xf32>
      %c0_26 = arith.constant 0 : index
      %c0_27 = arith.constant 0 : index
      %62 = vector.load %arg5[%c0_26, %c0_27] : memref<8x128xf32, #tpu.memory_space<vmem>>, vector<8x128xf32>
      tpu.vector_store %arg5[%c0_26, %c0_27], %61 {strides = array<i32>} : memref<8x128xf32, #tpu.memory_space<vmem>>, vector<8x128xf32>,
    } else {
    }
    %c0 = arith.constant 0 : index
    %c0_1 = arith.constant 0 : index
    %3 = vector.load %arg2[%c0, %c0_1] : memref<8x128xf32, #tpu.memory_space<vmem>>, vector<8x128xf32>
    %c0_2 = arith.constant 0 : index
    %c0_3 = arith.constant 0 : index
    %4 = vector.load %arg3[%c0_2, %c0_3] : memref<8x128xf32, #tpu.memory_space<vmem>>, vector<8x128xf32>
    %5 = math.absf %3 : vector<8x128xf32>
    %cst = arith.constant 0.000000e+00 : f32
    %6 = vector.broadcast %cst : f32 to vector<8x128xf32>
    %7 = arith.subf %6, %5 : vector<8x128xf32>
    %8 = math.exp %7 : vector<8x128xf32>
    %cst_4 = arith.constant 1.000000e+00 : f32
    %9 = vector.broadcast %cst_4 : f32 to vector<8x128xf32>
    %10 = arith.addf %9, %8 : vector<8x128xf32>
    %11 = math.log %10 : vector<8x128xf32>
    %cst_5 = arith.constant 0.000000e+00 : f32
    %12 = vector.broadcast %cst_5 : f32 to vector<8x128xf32>
    %13 = arith.cmpf oge, %3, %12 : vector<8x128xf32>
    %cst_6 = arith.constant 1.000000e+00 : f32
    %14 = vector.broadcast %cst_6 : f32 to vector<8x128xf32>
    %15 = arith.select %13, %14, %8 : vector<8x128xi1>, vector<8x128xf32>
    %16 = tpu.reciprocal %10 {approx = true} : vector<8x128xf32> -> vector<8x128xf32>
    %17 = arith.mulf %15, %16 : vector<8x128xf32>
    %cst_7 = arith.constant 0.000000e+00 : f32
    %18 = vector.broadcast %cst_7 : f32 to vector<8x128xf32>
    %19 = arith.minimumf %3, %18 : vector<8x128xf32>
    %20 = arith.subf %19, %11 : vector<8x128xf32>
    %cst_8 = arith.constant 0.000000e+00 : f32
    %21 = vector.broadcast %cst_8 : f32 to vector<8x128xf32>
    %22 = arith.maximumf %3, %21 : vector<8x128xf32>
    %cst_9 = arith.constant 0.000000e+00 : f32
    %23 = vector.broadcast %cst_9 : f32 to vector<8x128xf32>
    %24 = arith.subf %23, %22 : vector<8x128xf32>
    %25 = arith.subf %24, %11 : vector<8x128xf32>
    %cst_10 = arith.constant -1.000000e+02 : f32
    %26 = vector.broadcast %cst_10 : f32 to vector<8x128xf32>
    %27 = arith.maximumf %20, %26 : vector<8x128xf32>
    %cst_11 = arith.constant -1.000000e+02 : f32
    %28 = vector.broadcast %cst_11 : f32 to vector<8x128xf32>
    %29 = arith.maximumf %25, %28 : vector<8x128xf32>
    %30 = arith.subf %27, %29 : vector<8x128xf32>
    %31 = arith.mulf %4, %30 : vector<8x128xf32>
    %32 = arith.addf %29, %31 : vector<8x128xf32>
    %cst_12 = arith.constant 0.000000e+00 : f32
    %33 = vector.broadcast %cst_12 : f32 to vector<8x128xf32>
    %34 = arith.subf %33, %32 : vector<8x128xf32>
    %cst_13 = arith.constant 1.000000e+00 : f32
    %35 = vector.broadcast %cst_13 : f32 to vector<8x128xf32>
    %36 = arith.subf %35, %17 : vector<8x128xf32>
    %37 = arith.subf %17, %36 : vector<8x128xf32>
    %38 = arith.mulf %4, %37 : vector<8x128xf32>
    %39 = arith.addf %36, %38 : vector<8x128xf32>
    %cst_14 = arith.constant -5.000000e-01 : f32
    %40 = vector.broadcast %cst_14 : f32 to vector<8x128xf32>
    %41 = arith.mulf %40, %4 : vector<8x128xf32>
    %cst_15 = arith.constant 7.500000e-01 : f32
    %42 = vector.broadcast %cst_15 : f32 to vector<8x128xf32>
    %43 = arith.addf %42, %41 : vector<8x128xf32>
    %cst_16 = arith.constant 1.000000e+00 : f32
    %44 = vector.broadcast %cst_16 : f32 to vector<8x128xf32>
    %45 = arith.subf %44, %39 : vector<8x128xf32>
    %46 = arith.mulf %45, %45 : vector<8x128xf32>
    %cst_17 = arith.constant 0.000000e+00 : f32
    %47 = vector.broadcast %cst_17 : f32 to vector<8x128xf32>
    %48 = arith.subf %47, %43 : vector<8x128xf32>
    %49 = arith.mulf %48, %46 : vector<8x128xf32>
    %50 = math.log %39 : vector<8x128xf32>
    %51 = arith.mulf %49, %50 : vector<8x128xf32>
    %52 = arith.addf %51, %34 : vector<8x128xf32>
    %c0_18 = arith.constant 0 : index
    %c0_19 = arith.constant 0 : index
    %53 = vector.load %arg5[%c0_18, %c0_19] : memref<8x128xf32, #tpu.memory_space<vmem>>, vector<8x128xf32>
    %54 = vector.shape_cast %52 : vector<8x128xf32> to vector<1x8x128xf32>
    %cst_20 = arith.constant dense<0.000000e+00> : vector<8x128xf32>
    %55 = vector.multi_reduction <add>, %54, %cst_20 [0] : vector<1x8x128xf32> to vector<8x128xf32>
    %56 = arith.addf %53, %55 : vector<8x128xf32>
    %c0_21 = arith.constant 0 : index
    %c0_22 = arith.constant 0 : index
    %57 = vector.load %arg5[%c0_21, %c0_22] : memref<8x128xf32, #tpu.memory_space<vmem>>, vector<8x128xf32>
    tpu.vector_store %arg5[%c0_21, %c0_22], %56 {strides = array<i32>} : memref<8x128xf32, #tpu.memory_space<vmem>>, vector<8x128xf32>,
    %c0_i32_23 = arith.constant 0 : i32
    %58 = arith.cmpi eq, %arg1, %c0_i32_23 : i32
    %59 = arith.extui %58 : i1 to i32
    %c0_i32_24 = arith.constant 0 : i32
    %60 = arith.cmpi ne, %59, %c0_i32_24 : i32
    scf.if %60 {
      %c0_25 = arith.constant 0 : index
      %c0_26 = arith.constant 0 : index
      %61 = vector.load %arg5[%c0_25, %c0_26] : memref<8x128xf32, #tpu.memory_space<vmem>>, vector<8x128xf32>
      %c0_27 = arith.constant 0 : index
      %c0_28 = arith.constant 0 : index
      %c0_29 = arith.constant 0 : index
      %62 = vector.load %arg4[%c0_27, %c0_28, %c0_29] : memref<1x8x128xf32, #tpu.memory_space<vmem>>, vector<1x8x128xf32>
      %63 = vector.shape_cast %62 : vector<1x8x128xf32> to vector<8x128xf32>
      %64 = vector.shape_cast %61 : vector<8x128xf32> to vector<1x8x128xf32>
      tpu.vector_store %arg4[%c0_27, %c0_28, %c0_29], %64 {strides = array<i32>} : memref<1x8x128xf32, #tpu.memory_space<vmem>>, vector<1x8x128xf32>,
    } else {
    }
    return
  }
  func.func @transform_0(%arg0: i32, %arg1: i32) -> (i32, i32) {
    %c1_i32 = arith.constant 1 : i32
    %0 = arith.muli %arg0, %c1_i32 : i32
    %1 = arith.addi %0, %arg1 : i32
    %c1_i32_0 = arith.constant 1 : i32
    %2 = arith.minsi %1, %c1_i32_0 : i32
    %c0_i32 = arith.constant 0 : i32
    %c0_i32_1 = arith.constant 0 : i32
    return %2, %c0_i32 : i32, i32
  }
  func.func @transform_1(%arg0: i32, %arg1: i32) -> (i32, i32) {
    %c1_i32 = arith.constant 1 : i32
    %0 = arith.muli %arg0, %c1_i32 : i32
    %1 = arith.addi %0, %arg1 : i32
    %c1_i32_0 = arith.constant 1 : i32
    %2 = arith.minsi %1, %c1_i32_0 : i32
    %c0_i32 = arith.constant 0 : i32
    %c0_i32_1 = arith.constant 0 : i32
    return %2, %c0_i32 : i32, i32
  }
  func.func @transform_2(%arg0: i32, %arg1: i32) -> (i32, i32, i32) {
    %c0_i32 = arith.constant 0 : i32
    %c0_i32_0 = arith.constant 0 : i32
    %c0_i32_1 = arith.constant 0 : i32
    return %arg0, %c0_i32, %c0_i32_0 : i32, i32, i32
  }
}

</mosaic_0001>

<llo_original>
// kernel: tpu_custom_call.1
$region0: #{tpu_custom_call.1}
  #allocation0 [shape = 'u32[]', space=smem, size = 0x4, offset = 0x4, fixed_abs, tag = 'smem constant byte address 0x4 - core index']
  #allocation1 [shape = 'u32[72,128]{1,0:T(1,128)}', space=vmem, size = 0x9000, scoped, tag = 'internal scratch']
  #allocation2 [shape = 'f32[8,128]{1,0:T(8,128)}', space=vmem, size = 0x1000, scoped, tag = 'scratch operand']
  %s0 = inlined_call_operand.hbm [shape: f32[16,128], index: 0, kind: input, shape index: {}]
  %s1 = inlined_call_operand.hbm [shape: f32[16,128], index: 1, kind: input, shape index: {}]
  %s2 = inlined_call_operand.hbm [shape: f32[2,8,128], index: 2, kind: output, shape index: {}]
  %s3 = sld [smem:[#allocation0]]
  $region57: #{tpu_custom_call.1} parent=0
    _
  %s5 = ssub.s32 1, %s3
  %s6 = scalar_select 0, %s5, %s3
  $region1: #{tpu_custom_call.1} parent=0
    #allocation3 [shape = 'u8[8192]{0}', space=vmem, size = 0x2000, scoped, tag = 'input window, operand 0']
    #allocation4 [shape = 's32[2]{0}', space=sflag, size = 0x8, scoped, tag = 'scoped memory for tpu_custom_call.1']
    #allocation5 [shape = 's32[2]{0}', space=sflag, size = 0x8, scoped, tag = 'scoped memory for tpu_custom_call.1']
    #allocation6 [shape = 'u8[8192]{0}', space=vmem, size = 0x2000, scoped, tag = 'input window, operand 1']
    #allocation7 [shape = 's32[2]{0}', space=sflag, size = 0x8, scoped, tag = 'scoped memory for tpu_custom_call.1']
    #allocation8 [shape = 'u8[8192]{0}', space=vmem, size = 0x2000, scoped, tag = 'output window, operand 0']
    %7 = vsyncpa [#allocation4], 0
    %s8 = scalar_lea.sflag [#allocation4], 1
    %9 = vsyncpa %s8, 0
    %10 = vsyncpa [#allocation7], 0
    %s11 = scalar_lea.sflag [#allocation7], 1
    %12 = vsyncpa %s11, 0
    %13 = vsyncpa [#allocation5], 0
    %s14 = scalar_lea.sflag [#allocation5], 1
    %15 = vsyncpa %s14, 0
    loop: start=0, step=1, limit=4
    $region2: #{tpu_custom_call.1} parent=1 // loop_pre_header
      _
    $region3: #{tpu_custom_call.1} parent=1 // loop_header
      %s17 = sphi 0, %s21
      %p18 = scmp.ge.s32.totalorder %s17, 4
      %s24 = sphi 0, %s36
      %s25 = sphi 0, %s32
      %s26 = sphi 0, %s24
      %s27 = sphi 0, %s25
      %s28 = sphi 0, %s26
      %s29 = sphi 0, %s27
      %s45 = sphi 0, %s47
      %s48 = sphi 0, %s45
      %s49 = sphi 0, %s48
      %s65 = sphi 0, %s49
      %s77 = sphi 0, %s79
      %s80 = sphi 0, %s77
      %s81 = sphi 0, %s80
      %s97 = sphi 0, %s81
      %s103 = sphi 0, %s105
      %s106 = sphi 0, %s103
      %s107 = sphi 0, %s106
      %s123 = sphi 0, %s107
    $region4: #{tpu_custom_call.1} parent=1 // loop_header_branch
      %20 = sbr.rel (%p18) target = $region8
    $region5: #{tpu_custom_call.1} parent=1 // loop_body
      %s22 = ssub.s32 %s17, 1
      %s23 = ssub.s32 %s17, 2
      %s30 = sadd.s32 1, %s25
      %p31 = scmp.ge.s32.totalorder %s30, 1
      %s32 = scalar_select %p31, 0, %s30
      %s33 = sadd.s32 1, %s24
      %s34 = scalar_select %p31, %s33, %s24
      %p35 = scmp.ge.s32.totalorder %s34, 2
      %s36 = scalar_select %p35, 0, %s34
      %s37 = sadd.s32 %s24, %s25
      %p38 = scmp.lt.s32.totalorder %s37, 1
      %s39 = scalar_select %p38, %s37, 1
      %s40 = sadd.s32 %s36, %s32
      %p41 = scmp.lt.s32.totalorder %s40, 1
      %s42 = scalar_select %p41, %s40, 1
      %s43 = ssub.s32 %s39, %s42
      %p44 = scmp.eq.s32.totalorder %s43, 0
      %s46 = sadd.s32 %s45, 1
      %s47 = scalar_select %p44, %s45, %s46
      %p50 = pneg %p44
      %p51 = scmp.eq.s32.totalorder %s17, 1
      %p52 = por %p50, %p51
      %p53 = scmp.ne.s32.totalorder %s45, %s48
      %p54 = scmp.eq.s32.totalorder %s17, 0
      %p55 = por %p53, %p54
      %p56 = scmp.ne.s32.totalorder %s45, %s48
      %p57 = scmp.eq.s32.totalorder %s22, 1
      %p58 = por %p56, %p57
      %p59 = scmp.ne.s32.totalorder %s48, %s49
      %p60 = scmp.eq.s32.totalorder %s22, 0
      %p61 = por %p59, %p60
      %p62 = scmp.ne.s32.totalorder %s48, %s49
      %p63 = scmp.eq.s32.totalorder %s23, 1
      %p64 = por %p62, %p63
      %p66 = scmp.ne.s32.totalorder %s49, %s65
      %p67 = scmp.eq.s32.totalorder %s23, 0
      %p68 = por %p66, %p67
      %s69 = sadd.s32 %s24, %s25
      %p70 = scmp.lt.s32.totalorder %s69, 1
      %s71 = scalar_select %p70, %s69, 1
      %s72 = sadd.s32 %s36, %s32
      %p73 = scmp.lt.s32.totalorder %s72, 1
      %s74 = scalar_select %p73, %s72, 1
      %s75 = ssub.s32 %s71, %s74
      %p76 = scmp.eq.s32.totalorder %s75, 0
      %s78 = sadd.s32 %s77, 1
      %s79 = scalar_select %p76, %s77, %s78
      %p82 = pneg %p76
      %p83 = scmp.eq.s32.totalorder %s17, 1
      %p84 = por %p82, %p83
      %p85 = scmp.ne.s32.totalorder %s77, %s80
      %p86 = scmp.eq.s32.totalorder %s17, 0
      %p87 = por %p85, %p86
      %p88 = scmp.ne.s32.totalorder %s77, %s80
      %p89 = scmp.eq.s32.totalorder %s22, 1
      %p90 = por %p88, %p89
      %p91 = scmp.ne.s32.totalorder %s80, %s81
      %p92 = scmp.eq.s32.totalorder %s22, 0
      %p93 = por %p91, %p92
      %p94 = scmp.ne.s32.totalorder %s80, %s81
      %p95 = scmp.eq.s32.totalorder %s23, 1
      %p96 = por %p94, %p95
      %p98 = scmp.ne.s32.totalorder %s81, %s97
      %p99 = scmp.eq.s32.totalorder %s23, 0
      %p100 = por %p98, %p99
      %s101 = ssub.s32 %s24, %s36
      %p102 = scmp.eq.s32.totalorder %s101, 0
      %s104 = sadd.s32 %s103, 1
      %s105 = scalar_select %p102, %s103, %s104
      %p108 = pneg %p102
      %p109 = scmp.eq.s32.totalorder %s17, 1
      %p110 = por %p108, %p109
      %p111 = scmp.ne.s32.totalorder %s103, %s106
      %p112 = scmp.eq.s32.totalorder %s17, 0
      %p113 = por %p111, %p112
      %p114 = scmp.ne.s32.totalorder %s103, %s106
      %p115 = scmp.eq.s32.totalorder %s22, 1
      %p116 = por %p114, %p115
      %p117 = scmp.ne.s32.totalorder %s106, %s107
      %p118 = scmp.eq.s32.totalorder %s22, 0
      %p119 = por %p117, %p118
      %p120 = scmp.ne.s32.totalorder %s106, %s107
      %p121 = scmp.eq.s32.totalorder %s23, 1
      %p122 = por %p120, %p121
      %p124 = scmp.ne.s32.totalorder %s107, %s123
      %p125 = scmp.eq.s32.totalorder %s23, 0
      %p126 = por %p124, %p125
      %p127 = scmp.le.s32.totalorder 1, %s17
      %p128 = scmp.lt.s32.totalorder %s17, 3
      %p129 = pnand %p127, %p128
      %p130 = pneg %p129
      // Predicated region
      $region9: #{tpu_custom_call.1} parent=5 // pred_check
        _
      $region10: #{tpu_custom_call.1} parent=5 // pred_check_branch
        %132 = sbr.rel (%p129) target = $region12
      $region11: #{tpu_custom_call.1} parent=5 // pred_region
        %s133 = ssub.s32 %s17, 1
      $region12: #{tpu_custom_call.1} parent=5 // pred_fallthru
        _
      %p134 = scmp.lt.s32.totalorder %s17, 2
      // Predicated region
      $region13: #{tpu_custom_call.1} parent=5 // pred_check
        %p135 = pneg %p134
      $region14: #{tpu_custom_call.1} parent=5 // pred_check_branch
        %137 = sbr.rel (%p135) target = $region16
      $region15: #{tpu_custom_call.1} parent=5 // pred_region
        // Predicated region
        $region17: #{tpu_custom_call.1} parent=15 // pred_check
          %p138 = pneg %p55
        $region18: #{tpu_custom_call.1} parent=15 // pred_check_branch
          %140 = sbr.rel (%p138) target = $region20
        $region19: #{tpu_custom_call.1} parent=15 // pred_region
          %s141 = sand.u32 %s45, 1
          %s142 = scalar_lea.sflag [#allocation4], %s141
          %s143 = sand.u32 %s45, 1
          %s144 = smul.addr %s143, 8
          %s145 = scalar_lea.vmem [#allocation3], %s144
          %s146 = sadd.s32 %s24, %s25
          %p147 = scmp.lt.s32.totalorder %s146, 1
          %s148 = scalar_select %p147, %s146, 1
          %150 = vsyncadd %s142, 0
          %s151 = smul.addr %s148, 8
          %s152 = scalar_lea.hbm %s0, %s151
          %s154 = sshll.u32 %s152, 4
          %s155 = int_to_ptr.hbm [resolvable:$true] %s154
          %s156 = sshll.u32 %s145, 4
          %s157 = int_to_ptr.vmem [resolvable:$true] %s156
          %159 = dma.hbm_to_vmem [thread:$0]  %s155, 128, %s157, %s142
        $region20: #{tpu_custom_call.1} parent=15 // pred_fallthru
          _
        // Predicated region
        $region21: #{tpu_custom_call.1} parent=15 // pred_check
          %p160 = pneg %p87
        $region22: #{tpu_custom_call.1} parent=15 // pred_check_branch
          %162 = sbr.rel (%p160) target = $region24
        $region23: #{tpu_custom_call.1} parent=15 // pred_region
          %s163 = sand.u32 %s77, 1
          %s164 = scalar_lea.sflag [#allocation7], %s163
          %s165 = sand.u32 %s77, 1
          %s166 = smul.addr %s165, 8
          %s167 = scalar_lea.vmem [#allocation6], %s166
          %s168 = sadd.s32 %s24, %s25
          %p169 = scmp.lt.s32.totalorder %s168, 1
          %s170 = scalar_select %p169, %s168, 1
          %172 = vsyncadd %s164, 0
          %s173 = smul.addr %s170, 8
          %s174 = scalar_lea.hbm %s1, %s173
          %s176 = sshll.u32 %s174, 4
          %s177 = int_to_ptr.hbm [resolvable:$true] %s176
          %s178 = sshll.u32 %s167, 4
          %s179 = int_to_ptr.vmem [resolvable:$true] %s178
          %181 = dma.hbm_to_vmem [thread:$0]  %s177, 128, %s179, %s164
        $region24: #{tpu_custom_call.1} parent=15 // pred_fallthru
          _
      $region16: #{tpu_custom_call.1} parent=5 // pred_fallthru
        _
      %p182 = scmp.le.s32.totalorder 1, %s17
      %p183 = scmp.lt.s32.totalorder %s17, 3
      %p184 = pnand %p182, %p183
      %p185 = pneg %p184
      // Predicated region
      $region25: #{tpu_custom_call.1} parent=5 // pred_check
        _
      $region26: #{tpu_custom_call.1} parent=5 // pred_check_branch
        %187 = sbr.rel (%p184) target = $region28
      $region27: #{tpu_custom_call.1} parent=5 // pred_region
        %s188 = ssub.s32 %s17, 1
        %s189 = sand.u32 %s48, 1
        %s190 = scalar_lea.sflag [#allocation4], %s189
        %s191 = sand.u32 %s48, 1
        %s192 = smul.addr %s191, 8
        %s193 = scalar_lea.vmem [#allocation3], %s192
        // Predicated region
        $region29: #{tpu_custom_call.1} parent=27 // pred_check
          %p194 = pneg %p61
        $region30: #{tpu_custom_call.1} parent=27 // pred_check_branch
          %196 = sbr.rel (%p194) target = $region32
        $region31: #{tpu_custom_call.1} parent=27 // pred_region
          %198 = dma.done %s190, 128
        $region32: #{tpu_custom_call.1} parent=27 // pred_fallthru
          _
        %s199 = sand.u32 %s80, 1
        %s200 = scalar_lea.sflag [#allocation7], %s199
        %s201 = sand.u32 %s80, 1
        %s202 = smul.addr %s201, 8
        %s203 = scalar_lea.vmem [#allocation6], %s202
        // Predicated region
        $region33: #{tpu_custom_call.1} parent=27 // pred_check
          %p204 = pneg %p93
        $region34: #{tpu_custom_call.1} parent=27 // pred_check_branch
          %206 = sbr.rel (%p204) target = $region36
        $region35: #{tpu_custom_call.1} parent=27 // pred_region
          %208 = dma.done %s200, 128
        $region36: #{tpu_custom_call.1} parent=27 // pred_fallthru
          _
        %s209 = sand.u32 %s48, 1
        %s210 = scalar_lea.sflag [#allocation4], %s209
        %s211 = sand.u32 %s48, 1
        %s212 = smul.addr %s211, 8
        %s213 = scalar_lea.vmem [#allocation3], %s212
        %p214 = pneg %p61
        %p215 = pneg %p58
        %s216 = sand.u32 %s80, 1
        %s217 = scalar_lea.sflag [#allocation7], %s216
        %s218 = sand.u32 %s80, 1
        %s219 = smul.addr %s218, 8
        %s220 = scalar_lea.vmem [#allocation6], %s219
        %p221 = pneg %p93
        %p222 = pneg %p90
        %p223 = pneg %p119
        %p224 = pneg %p116
        %s225 = sand.u32 %s106, 1
        %s226 = scalar_lea.sflag [#allocation5], %s225
        %s227 = sand.u32 %s106, 1
        %s228 = smul.addr %s227, 8
        %s229 = scalar_lea.vmem [#allocation8], %s228
        %s230 = sadd.s32 %s26, %s27
        %p231 = scmp.lt.s32.totalorder %s230, 1
        %s232 = scalar_select %p231, %s230, 1
        %s233 = sadd.s32 %s26, %s27
        %p234 = scmp.lt.s32.totalorder %s233, 1
        %s235 = scalar_select %p234, %s233, 1
        %p236 = scmp.eq.s32.totalorder %s27, 0
        // Predicated region
        $region37: #{tpu_custom_call.1} parent=27 // pred_check
          %p237 = pneg %p236
        $region38: #{tpu_custom_call.1} parent=27 // pred_check_branch
          %239 = sbr.rel (%p237) target = $region40
        $region39: #{tpu_custom_call.1} parent=27 // pred_region
          %240 = vst [vmem:[#allocation2] sm:$0xff] 0.0
        $region40: #{tpu_custom_call.1} parent=27 // pred_fallthru
          _
        %v241 = vld [vmem:[%s193] sm:$0xff]
        %v242 = vld [vmem:[%s203] sm:$0xff]
        %v243 = vand.u32 2147483647, %v241
        %v244 = vsub.f32 0.0, %v243
        %v245 = vmul.f32 %v244, 1.442695
        %v246 = vpow.pop %v245
        %v247 = vadd.f32 %v246, 1.0
        %v248 = vlog2.pop %v247
        %v249 = vmul.f32 %v248, 0.6931472
        %vm250 = vcmp.ge.f32.partialorder %v241, 0.0
        %v251 = vsel %vm250, 1.0, %v246
        %v252 = vrcp.pop %v247
        %v253 = vmul.f32 %v251, %v252
        %v254 = vmin.f32 %v241, 0.0
        %v255 = vsub.f32 %v254, %v249
        %v256 = vmax.f32 %v241, 0.0
        %v257 = vsub.f32 0.0, %v256
        %v258 = vsub.f32 %v257, %v249
        %v259 = vmax.f32 %v255, -100.0
        %v260 = vmax.f32 %v258, -100.0
        %v261 = vsub.f32 %v259, %v260
        %v262 = vmul.f32 %v242, %v261
        %v263 = vadd.f32 %v260, %v262
        %v264 = vsub.f32 0.0, %v263
        %v265 = vsub.f32 1.0, %v253
        %v266 = vsub.f32 %v253, %v265
        %v267 = vmul.f32 %v242, %v266
        %v268 = vadd.f32 %v265, %v267
        %v269 = vmul.f32 %v242, -0.5
        %v270 = vadd.f32 %v269, 0.75
        %v271 = vsub.f32 1.0, %v268
        %v272 = vmul.f32 %v271, %v271
        %v273 = vsub.f32 0.0, %v270
        %v274 = vmul.f32 %v273, %v272
        %v275 = vlog2.pop %v268
        %v276 = vmul.f32 %v275, 0.6931472
        %v277 = vmul.f32 %v274, %v276
        %v278 = vadd.f32 %v277, %v264
        %v279 = vld [vmem:[#allocation2] sm:$0xff]
        %v280 = vadd.f32 %v278, 0.0
        %v281 = vadd.f32 %v279, %v280
        %282 = vst [vmem:[#allocation2] sm:$0xff] %v281
        // Predicated region
        $region41: #{tpu_custom_call.1} parent=27 // pred_check
          %p283 = pneg %p236
        $region42: #{tpu_custom_call.1} parent=27 // pred_check_branch
          %285 = sbr.rel (%p283) target = $region44
        $region43: #{tpu_custom_call.1} parent=27 // pred_region
          %v286 = vld [vmem:[#allocation2] sm:$0xff]
          %287 = vst [vmem:[%s229] sm:$0xff] %v286
        $region44: #{tpu_custom_call.1} parent=27 // pred_fallthru
          _
        %s288 = sand.u32 %s106, 1
        %s289 = scalar_lea.sflag [#allocation5], %s288
        %s290 = sand.u32 %s106, 1
        %s291 = smul.addr %s290, 8
        %s292 = scalar_lea.vmem [#allocation8], %s291
        // Predicated region
        $region45: #{tpu_custom_call.1} parent=27 // pred_check
          %p293 = pneg %p116
        $region46: #{tpu_custom_call.1} parent=27 // pred_check_branch
          %295 = sbr.rel (%p293) target = $region48
        $region47: #{tpu_custom_call.1} parent=27 // pred_region
          %297 = vsyncadd %s289, 0
          %s298 = smul.addr %s26, 8
          %s299 = scalar_lea.hbm %s2, %s298
          %s301 = sshll.u32 %s292, 4
          %s302 = int_to_ptr.vmem [resolvable:$true] %s301
          %s303 = sshll.u32 %s299, 4
          %s304 = int_to_ptr.hbm [resolvable:$true] %s303
          %306 = dma.vmem_to_hbm [thread:$0]  %s302, 128, %s304, %s289
        $region48: #{tpu_custom_call.1} parent=27 // pred_fallthru
          _
      $region28: #{tpu_custom_call.1} parent=5 // pred_fallthru
        _
      %p307 = scmp.le.s32.totalorder 2, %s17
      // Predicated region
      $region49: #{tpu_custom_call.1} parent=5 // pred_check
        %p308 = pneg %p307
      $region50: #{tpu_custom_call.1} parent=5 // pred_check_branch
        %310 = sbr.rel (%p308) target = $region52
      $region51: #{tpu_custom_call.1} parent=5 // pred_region
        %s311 = ssub.s32 %s17, 2
        // Predicated region
        $region53: #{tpu_custom_call.1} parent=51 // pred_check
          %p312 = pneg %p122
        $region54: #{tpu_custom_call.1} parent=51 // pred_check_branch
          %314 = sbr.rel (%p312) target = $region56
        $region55: #{tpu_custom_call.1} parent=51 // pred_region
          %s315 = sand.u32 %s107, 1
          %s316 = scalar_lea.sflag [#allocation5], %s315
          %s317 = sand.u32 %s107, 1
          %s318 = smul.addr %s317, 8
          %s319 = scalar_lea.vmem [#allocation8], %s318
          %321 = dma.done %s316, 128
        $region56: #{tpu_custom_call.1} parent=51 // pred_fallthru
          _
      $region52: #{tpu_custom_call.1} parent=5 // pred_fallthru
        _
    $region6: #{tpu_custom_call.1} parent=1 // loop_footer
      %s21 = sadd.s32 1, %s17
    $region7: #{tpu_custom_call.1} parent=1 // loop_footer_branch
      %16 = sbr.rel target = $region3
    $region8: #{tpu_custom_call.1} parent=1 // loop_exit
      _
    %322 = vsyncpa [#allocation4], 1
    %s323 = scalar_lea.sflag [#allocation4], 1
    %324 = vsyncpa %s323, 1
    %325 = vsyncpa [#allocation7], 1
    %s326 = scalar_lea.sflag [#allocation7], 1
    %327 = vsyncpa %s326, 1
    %328 = vsyncpa [#allocation5], 1
    %s329 = scalar_lea.sflag [#allocation5], 1
    %330 = vsyncpa %s329, 1

</llo_original>
